<compile_context>
chip_gen: v5e
topology: v5e:2x2
jax: 0.10.0
libtpu: 0.0.40
codegen_flags: <defaults>
</compile_context>

<pallas_src>
import functools

import jax
import jax.numpy as jnp
from jax import lax
from jax.experimental import pallas as pl
from jax.experimental.pallas import tpu as pltpu

INPUT_SIZE = 5
KPAD = 8          # K padded 5 -> 8 so layer 1 runs on the MXU
HIDDEN = 64
OUT = 1
LANE = 128


def _round_up(n: int, m: int) -> int:
    return ((n + m - 1) // m) * m


def _pinn_kernel(x_ref, w1_ref, b1_ref, w2_ref, b2_ref, w3_ref, b3_ref, o_ref,
                 *, n_chunks, act_dtype):
    # x_ref: (n_chunks, 8, chunk)   o_ref: (n_chunks, 1, chunk)
    # w1: (64, 8)  b1: (64, 1)  w2: (64, 64)  b2: (64, 1)  w3: (8, 64)  b3: (1, 1)
    w1 = w1_ref[...]
    b1 = b1_ref[...]
    b2 = b2_ref[...]
    b3 = b3_ref[...]
    # Cast weights once outside the chunk loop (no-op when act_dtype == f32).
    w2 = w2_ref[...].astype(act_dtype)
    w3 = w3_ref[...].astype(act_dtype)

    def body(c, carry):
        xb = x_ref[c]                                                  # (8, chunk)
        # Layer 1 (MXU, K padded to 8; pad rows/cols are zero so it is exact).
        z1 = jnp.dot(w1, xb, preferred_element_type=jnp.float32) + b1  # (64, chunk)
        h1 = jnp.tanh(z1.astype(act_dtype))                            # EUP
        # Layer 2 (MXU 64x64).
        z2 = jnp.dot(w2, h1, preferred_element_type=jnp.float32) + b2  # (64, chunk)
        h2 = jnp.tanh(z2.astype(act_dtype))                            # EUP
        # Layer 3 (MXU; w3 is an (8, 64) block with rows 1..7 zero).
        y = jnp.dot(w3, h2, preferred_element_type=jnp.float32)        # (8, chunk)
        o_ref[c] = (y[0:1, :] + b3).astype(o_ref.dtype)                # lane-dense store
        return carry

    lax.fori_loop(0, n_chunks, body, 0, unroll=True)


@functools.partial(jax.jit, static_argnames=("tile_b", "chunk", "use_bf16_tanh"))
def pinn_forward(x, params, tile_b=4096, chunk=256, use_bf16_tanh=False):
    """x: (B, 5) float32 -> (B, 1) float32."""
    assert chunk % LANE == 0 and tile_b % LANE == 0, "chunk/tile must be lane-aligned"
    w1, b1, w2, b2, w3, b3 = params           # PyTorch (out, in) / (out,) layouts
    B = x.shape[0]

    # --- tiling: chunk <= 512 columns, tile a multiple of chunk, >= 2 tiles when
    #     there is enough work (so the "parallel" axis shards across v7x's 2 TCs).
    chunk_eff = min(chunk, _round_up(max(B, 1), LANE))
    half = _round_up(pl.cdiv(max(B, 1), 2), chunk_eff)
    tb = max(chunk_eff, min(_round_up(tile_b, chunk_eff), half))
    n_chunks = tb // chunk_eff
    Bp = _round_up(B, tb)
    total_chunks = Bp // chunk_eff
    n_tiles = Bp // tb

    # --- one fused pad (batch B->Bp AND feature 5->8), one minor-dim transpose.
    xp = jnp.pad(x.astype(jnp.float32), ((0, Bp - B), (0, KPAD - INPUT_SIZE)))
    x_fm = xp.reshape(total_chunks, chunk_eff, KPAD).transpose(0, 2, 1)  # (TC, 8, chunk)

    # --- kernel-layout weights (tiny; zero padding keeps MXU results exact).
    w1p = jnp.pad(w1.astype(jnp.float32), ((0, 0), (0, KPAD - INPUT_SIZE)))   # (64, 8)
    b1c = b1.astype(jnp.float32).reshape(HIDDEN, 1)
    w2c = w2.astype(jnp.float32)                                              # (64, 64)
    b2c = b2.astype(jnp.float32).reshape(HIDDEN, 1)
    w3p = jnp.pad(w3.astype(jnp.float32), ((0, KPAD - OUT), (0, 0)))          # (8, 64)
    b3c = b3.astype(jnp.float32).reshape(1, 1)

    kernel = functools.partial(
        _pinn_kernel,
        n_chunks=n_chunks,
        act_dtype=jnp.bfloat16 if use_bf16_tanh else jnp.float32,
    )

    weight_bytes = 4 * (HIDDEN * KPAD + HIDDEN + HIDDEN * HIDDEN + HIDDEN + KPAD * HIDDEN + 1)
    cost = pl.CostEstimate(
        flops=2 * HIDDEN * (KPAD + HIDDEN + KPAD) * Bp,
        transcendentals=2 * HIDDEN * Bp,
        bytes_accessed=(KPAD + OUT) * 4 * Bp + weight_bytes,
    )

    out = pl.pallas_call(
        kernel,
        out_shape=jax.ShapeDtypeStruct((total_chunks, OUT, chunk_eff), jnp.float32),
        grid_spec=pltpu.PrefetchScalarGridSpec(
            num_scalar_prefetch=0,
            grid=(n_tiles,),
            in_specs=[
                pl.BlockSpec((n_chunks, KPAD, chunk_eff), lambda i: (i, 0, 0)),  # x tile
                pl.BlockSpec((HIDDEN, KPAD), lambda i: (0, 0)),                  # w1 (64, 8)
                pl.BlockSpec((HIDDEN, 1), lambda i: (0, 0)),                     # b1
                pl.BlockSpec((HIDDEN, HIDDEN), lambda i: (0, 0)),                # w2
                pl.BlockSpec((HIDDEN, 1), lambda i: (0, 0)),                     # b2
                pl.BlockSpec((KPAD, HIDDEN), lambda i: (0, 0)),                  # w3 (8, 64)
                pl.BlockSpec((OUT, 1), lambda i: (0, 0)),                        # b3
            ],
            out_specs=pl.BlockSpec((n_chunks, OUT, chunk_eff), lambda i: (i, 0, 0)),
        ),
        compiler_params=pltpu.CompilerParams(
            dimension_semantics=("parallel",),      # batch tiles shard across TCs
            vmem_limit_bytes=32 * 1024 * 1024,      # explicit (v5e default is 16 MiB)
        ),
        cost_estimate=cost,
    )(x_fm, w1p, b1c, w2c, b2c, w3p, b3c)

    return out.reshape(Bp)[:B][:, None]


def init_params(key):
    """PyTorch nn.Linear-style init and layouts: w (out, in), b (out,)."""
    keys = jax.random.split(key, 6)

    def linear(kw, kb, fan_in, fan_out):
        bound = 1.0 / jnp.sqrt(float(fan_in))
        w = jax.random.uniform(kw, (fan_out, fan_in), jnp.float32, -bound, bound)
        b = jax.random.uniform(kb, (fan_out,), jnp.float32, -bound, bound)
        return w, b

    w1, b1 = linear(keys[0], keys[1], INPUT_SIZE, HIDDEN)
    w2, b2 = linear(keys[2], keys[3], HIDDEN, HIDDEN)
    w3, b3 = linear(keys[4], keys[5], HIDDEN, OUT)
    return (w1, b1, w2, b2, w3, b3)


def pinn_forward_ref(x, params):
    """Pure-JAX reference matching the PyTorch module."""
    w1, b1, w2, b2, w3, b3 = params
    h1 = jnp.tanh(x @ w1.T + b1)
    h2 = jnp.tanh(h1 @ w2.T + b2)
    return h2 @ w3.T + b3


# TODO(synk): physics_loss (Archard wear-law MSE) is a training-time loss, not part
# of forward(); it stays in plain JAX outside the kernel.

if __name__ == "__main__":
    key = jax.random.PRNGKey(0)
    k_params, k_x1, k_x2, k_x3 = jax.random.split(key, 4)
    params = init_params(k_params)

    # Primary small-shape check (B=8, input_size=5).
    x = jax.random.normal(k_x1, (8, INPUT_SIZE), jnp.float32)
    y = jax.block_until_ready(pinn_forward(x, params))
    y_ref = pinn_forward_ref(x, params)
    assert y.shape == (8, OUT), y.shape
    assert jnp.allclose(y, y_ref, atol=1e-5, rtol=1e-5), float(jnp.max(jnp.abs(y - y_ref)))

    # Check exercising batch padding to a lane-aligned chunk.
    x2 = jax.random.normal(k_x2, (200, INPUT_SIZE), jnp.float32)
    y2 = jax.block_until_ready(pinn_forward(x2, params))
    y2_ref = pinn_forward_ref(x2, params)
    assert y2.shape == (200, OUT), y2.shape
    assert jnp.allclose(y2, y2_ref, atol=1e-5, rtol=1e-5), float(jnp.max(jnp.abs(y2 - y2_ref)))

    # Check exercising multiple chunks per tile and multiple grid tiles.
    x3 = jax.random.normal(k_x3, (1000, INPUT_SIZE), jnp.float32)
    y3 = jax.block_until_ready(pinn_forward(x3, params, tile_b=512, chunk=256))
    y3_ref = pinn_forward_ref(x3, params)
    assert y3.shape == (1000, OUT), y3.shape
    assert jnp.allclose(y3, y3_ref, atol=1e-5, rtol=1e-5), float(jnp.max(jnp.abs(y3 - y3_ref)))

    # Optional bf16-tanh fast path (v6e/v7x EUP lever); loose tolerance by design.
    y3b = jax.block_until_ready(pinn_forward(x3, params, tile_b=512, chunk=256,
                                             use_bf16_tanh=True))
    assert jnp.allclose(y3b, y3_ref, atol=1e-1), float(jnp.max(jnp.abs(y3b - y3_ref)))

    print("KERNEL_OK")
</pallas_src>

<mosaic_0001>
module attributes {stable_mosaic.version = 11 : i64} {
  func.func @_pinn_kernel(%arg0: i32, %arg1: memref<1x8x128xf32, #tpu.memory_space<vmem>>, %arg2: memref<64x8xf32, #tpu.memory_space<vmem>>, %arg3: memref<64x1xf32, #tpu.memory_space<vmem>>, %arg4: memref<64x64xf32, #tpu.memory_space<vmem>>, %arg5: memref<64x1xf32, #tpu.memory_space<vmem>>, %arg6: memref<8x64xf32, #tpu.memory_space<vmem>>, %arg7: memref<1x1xf32, #tpu.memory_space<vmem>>, %arg8: memref<1x1x128xf32, #tpu.memory_space<vmem>>) attributes {dimension_semantics = [#tpu.dimension_semantics<parallel>], iteration_bounds = array<i64: 1>, scalar_prefetch = 0 : i64, scratch_operands = 0 : i64, tpu.core_type = #tpu.core_type<tc>, window_params = [{transform_indices = @transform_0, window_bounds = array<i64: 1, 8, 128>}, {pipeline_mode = #tpu.pipeline_mode<synchronous>, transform_indices = @transform_1, window_bounds = array<i64: 64, 8>}, {pipeline_mode = #tpu.pipeline_mode<synchronous>, transform_indices = @transform_2, window_bounds = array<i64: 64, 1>}, {pipeline_mode = #tpu.pipeline_mode<synchronous>, transform_indices = @transform_3, window_bounds = array<i64: 64, 64>}, {pipeline_mode = #tpu.pipeline_mode<synchronous>, transform_indices = @transform_4, window_bounds = array<i64: 64, 1>}, {pipeline_mode = #tpu.pipeline_mode<synchronous>, transform_indices = @transform_5, window_bounds = array<i64: 8, 64>}, {pipeline_mode = #tpu.pipeline_mode<synchronous>, transform_indices = @transform_6, window_bounds = array<i64: 1, 1>}, {transform_indices = @transform_7, window_bounds = array<i64: 1, 1, 128>}]} {
    %c0 = arith.constant 0 : index
    %c0_0 = arith.constant 0 : index
    %0 = vector.load %arg2[%c0, %c0_0] : memref<64x8xf32, #tpu.memory_space<vmem>>, vector<64x8xf32>
    %c0_1 = arith.constant 0 : index
    %c0_2 = arith.constant 0 : index
    %1 = vector.load %arg3[%c0_1, %c0_2] : memref<64x1xf32, #tpu.memory_space<vmem>>, vector<64x1xf32>
    %c0_3 = arith.constant 0 : index
    %c0_4 = arith.constant 0 : index
    %2 = vector.load %arg5[%c0_3, %c0_4] : memref<64x1xf32, #tpu.memory_space<vmem>>, vector<64x1xf32>
    %c0_5 = arith.constant 0 : index
    %c0_6 = arith.constant 0 : index
    %3 = vector.load %arg7[%c0_5, %c0_6] : memref<1x1xf32, #tpu.memory_space<vmem>>, vector<1x1xf32>
    %c0_7 = arith.constant 0 : index
    %c0_8 = arith.constant 0 : index
    %4 = vector.load %arg4[%c0_7, %c0_8] : memref<64x64xf32, #tpu.memory_space<vmem>>, vector<64x64xf32>
    %c0_9 = arith.constant 0 : index
    %c0_10 = arith.constant 0 : index
    %5 = vector.load %arg6[%c0_9, %c0_10] : memref<8x64xf32, #tpu.memory_space<vmem>>, vector<8x64xf32>
    %c0_i32 = arith.constant 0 : i32
    %6 = arith.index_cast %c0_i32 : i32 to index
    %c0_11 = arith.constant 0 : index
    %c0_12 = arith.constant 0 : index
    %7 = vector.load %arg1[%6, %c0_11, %c0_12] : memref<1x8x128xf32, #tpu.memory_space<vmem>>, vector<1x8x128xf32>
    %8 = vector.shape_cast %7 : vector<1x8x128xf32> to vector<8x128xf32>
    %cst = arith.constant dense<0.000000e+00> : vector<64x128xf32>
    %9 = tpu.matmul %0, %8, %cst {dimension_numbers = #tpu.dot_dimension_numbers<[1], [0], [0], [1], [0, 0, 1, 1], [], []>} : vector<64x8xf32>, vector<8x128xf32>, vector<64x128xf32> -> vector<64x128xf32>
    %10 = vector.broadcast %1 : vector<64x1xf32> to vector<64x128xf32>
    %11 = arith.addf %9, %10 : vector<64x128xf32>
    %12 = math.tanh %11 : vector<64x128xf32>
    %cst_13 = arith.constant dense<0.000000e+00> : vector<64x128xf32>
    %13 = tpu.matmul %4, %12, %cst_13 {dimension_numbers = #tpu.dot_dimension_numbers<[1], [0], [0], [1], [0, 0, 1, 1], [], []>} : vector<64x64xf32>, vector<64x128xf32>, vector<64x128xf32> -> vector<64x128xf32>
    %14 = vector.broadcast %2 : vector<64x1xf32> to vector<64x128xf32>
    %15 = arith.addf %13, %14 : vector<64x128xf32>
    %16 = math.tanh %15 : vector<64x128xf32>
    %cst_14 = arith.constant dense<0.000000e+00> : vector<8x128xf32>
    %17 = tpu.matmul %5, %16, %cst_14 {dimension_numbers = #tpu.dot_dimension_numbers<[1], [0], [0], [1], [0, 0, 1, 1], [], []>} : vector<8x64xf32>, vector<64x128xf32>, vector<8x128xf32> -> vector<8x128xf32>
    %18 = vector.extract_strided_slice %17 {offsets = [0, 0], sizes = [1, 128], strides = [1, 1]} : vector<8x128xf32> to vector<1x128xf32>
    %19 = vector.broadcast %3 : vector<1x1xf32> to vector<1x128xf32>
    %20 = arith.addf %18, %19 : vector<1x128xf32>
    %21 = arith.index_cast %c0_i32 : i32 to index
    %c0_15 = arith.constant 0 : index
    %c0_16 = arith.constant 0 : index
    %22 = vector.load %arg8[%21, %c0_15, %c0_16] : memref<1x1x128xf32, #tpu.memory_space<vmem>>, vector<1x1x128xf32>
    %23 = vector.shape_cast %22 : vector<1x1x128xf32> to vector<1x128xf32>
    %24 = vector.shape_cast %20 : vector<1x128xf32> to vector<1x1x128xf32>
    tpu.vector_store %arg8[%21, %c0_15, %c0_16], %24 {strides = array<i32>} : memref<1x1x128xf32, #tpu.memory_space<vmem>>, vector<1x1x128xf32>,
    %c1_i32 = arith.constant 1 : i32
    return
  }
  func.func @transform_0(%arg0: i32) -> (i32, i32, i32) {
    %c0_i32 = arith.constant 0 : i32
    %c0_i32_0 = arith.constant 0 : i32
    %c0_i32_1 = arith.constant 0 : i32
    return %arg0, %c0_i32, %c0_i32_0 : i32, i32, i32
  }
  func.func @transform_1(%arg0: i32) -> (i32, i32) {
    %c0_i32 = arith.constant 0 : i32
    %c0_i32_0 = arith.constant 0 : i32
    %c0_i32_1 = arith.constant 0 : i32
    return %c0_i32, %c0_i32_0 : i32, i32
  }
  func.func @transform_2(%arg0: i32) -> (i32, i32) {
    %c0_i32 = arith.constant 0 : i32
    %c0_i32_0 = arith.constant 0 : i32
    %c0_i32_1 = arith.constant 0 : i32
    return %c0_i32, %c0_i32_0 : i32, i32
  }
  func.func @transform_3(%arg0: i32) -> (i32, i32) {
    %c0_i32 = arith.constant 0 : i32
    %c0_i32_0 = arith.constant 0 : i32
    %c0_i32_1 = arith.constant 0 : i32
    return %c0_i32, %c0_i32_0 : i32, i32
  }
  func.func @transform_4(%arg0: i32) -> (i32, i32) {
    %c0_i32 = arith.constant 0 : i32
    %c0_i32_0 = arith.constant 0 : i32
    %c0_i32_1 = arith.constant 0 : i32
    return %c0_i32, %c0_i32_0 : i32, i32
  }
  func.func @transform_5(%arg0: i32) -> (i32, i32) {
    %c0_i32 = arith.constant 0 : i32
    %c0_i32_0 = arith.constant 0 : i32
    %c0_i32_1 = arith.constant 0 : i32
    return %c0_i32, %c0_i32_0 : i32, i32
  }
  func.func @transform_6(%arg0: i32) -> (i32, i32) {
    %c0_i32 = arith.constant 0 : i32
    %c0_i32_0 = arith.constant 0 : i32
    %c0_i32_1 = arith.constant 0 : i32
    return %c0_i32, %c0_i32_0 : i32, i32
  }
  func.func @transform_7(%arg0: i32) -> (i32, i32, i32) {
    %c0_i32 = arith.constant 0 : i32
    %c0_i32_0 = arith.constant 0 : i32
    %c0_i32_1 = arith.constant 0 : i32
    return %arg0, %c0_i32, %c0_i32_0 : i32, i32, i32
  }
}

</mosaic_0001>

<llo_original>
// kernel: pinn_forward.1
$region0: #{pinn_forward.1}
  #allocation0 [shape = 'u32[]', space=smem, size = 0x4, offset = 0x4, fixed_abs, tag = 'smem constant byte address 0x4 - core index']
  #allocation1 [shape = 'u32[72,128]{1,0:T(1,128)}', space=vmem, size = 0x9000, scoped, tag = 'internal scratch']
  #allocation2 [shape = 'f32[1,1]{1,0:T(1,128)S(1)}', space=vmem, size = 0x200, scoped, tag = 'scoped memory for pinn_forward.1']
  %s0 = inlined_call_operand.vmem [shape: f32[1,8,128], index: 0, kind: input, shape index: {}]
  %s1 = inlined_call_operand.vmem [shape: f32[64,8], index: 1, kind: input, shape index: {}]
  %s2 = inlined_call_operand.vmem [shape: f32[64,1], index: 2, kind: input, shape index: {}]
  %s3 = inlined_call_operand.vmem [shape: f32[64,64], index: 3, kind: input, shape index: {}]
  %s4 = inlined_call_operand.vmem [shape: f32[64,1], index: 4, kind: input, shape index: {}]
  %s5 = inlined_call_operand.vmem [shape: f32[8,64], index: 5, kind: input, shape index: {}]
  %s6 = inlined_call_operand.<no memory space> [shape: f32[1,1], index: 6, kind: input, shape index: {}]
  %s7 = inlined_call_operand.vmem [shape: f32[1,1,128], index: 7, kind: output, shape index: {}]
  %s8 = sld [smem:[#allocation0]]
  $region38: #{pinn_forward.1} parent=0
    _
  %s10 = ssub.s32 1, %s8
  %s11 = scalar_select 0, %s10, %s8
  %v12 = vstv %s6
  %13 = vst [vmem:[#allocation2] sm:$0x1] %v12
  // Predicated region
  $region2: #{pinn_forward.1} parent=0 // pred_check
    _
  $region3: #{pinn_forward.1} parent=0 // pred_check_branch
    %15 = sbr.rel (0) target = $region5
  $region4: #{pinn_forward.1} parent=0 // pred_region
    _
  $region5: #{pinn_forward.1} parent=0 // pred_fallthru
    _
  // Predicated region
  $region6: #{pinn_forward.1} parent=0 // pred_check
    _
  $region7: #{pinn_forward.1} parent=0 // pred_check_branch
    %17 = sbr.rel (0) target = $region9
  $region8: #{pinn_forward.1} parent=0 // pred_region
    _
  $region9: #{pinn_forward.1} parent=0 // pred_fallthru
    _
  // Predicated region
  $region10: #{pinn_forward.1} parent=0 // pred_check
    _
  $region11: #{pinn_forward.1} parent=0 // pred_check_branch
    %19 = sbr.rel (0) target = $region13
  $region12: #{pinn_forward.1} parent=0 // pred_region
    _
  $region13: #{pinn_forward.1} parent=0 // pred_fallthru
    _
  // Predicated region
  $region14: #{pinn_forward.1} parent=0 // pred_check
    _
  $region15: #{pinn_forward.1} parent=0 // pred_check_branch
    %21 = sbr.rel (0) target = $region17
  $region16: #{pinn_forward.1} parent=0 // pred_region
    _
  $region17: #{pinn_forward.1} parent=0 // pred_fallthru
    _
  // Predicated region
  $region18: #{pinn_forward.1} parent=0 // pred_check
    _
  $region19: #{pinn_forward.1} parent=0 // pred_check_branch
    %23 = sbr.rel (0) target = $region21
  $region20: #{pinn_forward.1} parent=0 // pred_region
    _
  $region21: #{pinn_forward.1} parent=0 // pred_fallthru
    _
  // Predicated region
  $region22: #{pinn_forward.1} parent=0 // pred_check
    _
  $region23: #{pinn_forward.1} parent=0 // pred_check_branch
    %25 = sbr.rel (0) target = $region25
  $region24: #{pinn_forward.1} parent=0 // pred_region
    _
  $region25: #{pinn_forward.1} parent=0 // pred_fallthru
    _
  // Predicated region
  $region26: #{pinn_forward.1} parent=0 // pred_check
    _
  $region27: #{pinn_forward.1} parent=0 // pred_check_branch
    %27 = sbr.rel (0) target = $region29
  $region28: #{pinn_forward.1} parent=0 // pred_region
    _
  $region29: #{pinn_forward.1} parent=0 // pred_fallthru
    _
  %v28 = vld [vmem:[%s1] sm:$0xff]
  %v29 = vld [vmem:[%s1 + $0x8] sm:$0xff]
  %v30 = vld [vmem:[%s1 + $0x10] sm:$0xff]
  %v31 = vld [vmem:[%s1 + $0x18] sm:$0xff]
  %v32 = vld [vmem:[%s1 + $0x20] sm:$0xff]
  %v33 = vld [vmem:[%s1 + $0x28] sm:$0xff]
  %v34 = vld [vmem:[%s1 + $0x30] sm:$0xff]
  %v35 = vld [vmem:[%s1 + $0x38] sm:$0xff]
  %v36 = vld [vmem:[%s2] sm:$0xff]
  %v37 = vld [vmem:[%s2 + $0x8] sm:$0xff]
  %v38 = vld [vmem:[%s2 + $0x10] sm:$0xff]
  %v39 = vld [vmem:[%s2 + $0x18] sm:$0xff]
  %v40 = vld [vmem:[%s2 + $0x20] sm:$0xff]
  %v41 = vld [vmem:[%s2 + $0x28] sm:$0xff]
  %v42 = vld [vmem:[%s2 + $0x30] sm:$0xff]
  %v43 = vld [vmem:[%s2 + $0x38] sm:$0xff]
  %v44 = vld [vmem:[%s4] sm:$0xff]
  %v45 = vld [vmem:[%s4 + $0x8] sm:$0xff]
  %v46 = vld [vmem:[%s4 + $0x10] sm:$0xff]
  %v47 = vld [vmem:[%s4 + $0x18] sm:$0xff]
  %v48 = vld [vmem:[%s4 + $0x20] sm:$0xff]
  %v49 = vld [vmem:[%s4 + $0x28] sm:$0xff]
  %v50 = vld [vmem:[%s4 + $0x30] sm:$0xff]
  %v51 = vld [vmem:[%s4 + $0x38] sm:$0xff]
  %v52 = vld [vmem:[#allocation2] sm:$0x1]
  %v53 = vld [vmem:[%s3] sm:$0xff]
  %v54 = vld [vmem:[%s3 + $0x8] sm:$0xff]
  %v55 = vld [vmem:[%s3 + $0x10] sm:$0xff]
  %v56 = vld [vmem:[%s3 + $0x18] sm:$0xff]
  %v57 = vld [vmem:[%s3 + $0x20] sm:$0xff]
  %v58 = vld [vmem:[%s3 + $0x28] sm:$0xff]
  %v59 = vld [vmem:[%s3 + $0x30] sm:$0xff]
  %v60 = vld [vmem:[%s3 + $0x38] sm:$0xff]
  %v61 = vld [vmem:[%s5] sm:$0xff]
  %v62 = vld [vmem:[%s0] sm:$0xff]
  %64 = vset.pattern.permute.xlu0 0
  %65 = vperm.xlu0 %64, %v36
  %v66 = vpop.permute.xlu0 %65
  %69 = vset.pattern.permute.xlu0 0
  %70 = vperm.xlu0 %69, %v37
  %v71 = vpop.permute.xlu0 %70
  %74 = vset.pattern.permute.xlu0 0
  %75 = vperm.xlu0 %74, %v38
  %v76 = vpop.permute.xlu0 %75
  %79 = vset.pattern.permute.xlu0 0
  %80 = vperm.xlu0 %79, %v39
  %v81 = vpop.permute.xlu0 %80
  %84 = vset.pattern.permute.xlu0 0
  %85 = vperm.xlu0 %84, %v40
  %v86 = vpop.permute.xlu0 %85
  %89 = vset.pattern.permute.xlu0 0
  %90 = vperm.xlu0 %89, %v41
  %v91 = vpop.permute.xlu0 %90
  %94 = vset.pattern.permute.xlu0 0
  %95 = vperm.xlu0 %94, %v42
  %v96 = vpop.permute.xlu0 %95
  %99 = vset.pattern.permute.xlu0 0
  %100 = vperm.xlu0 %99, %v43
  %v101 = vpop.permute.xlu0 %100
  %vm103 = vcmask 64512
  %v105 = vsel %vm103, %v28, 0
  %v108 = vsel %vm103, %v29, 0
  %v111 = vsel %vm103, %v30, 0
  %v114 = vsel %vm103, %v31, 0
  %v117 = vsel %vm103, %v32, 0
  %v120 = vsel %vm103, %v33, 0
  %v123 = vsel %vm103, %v34, 0
  %v126 = vsel %vm103, %v35, 0
  %128 = vmatpush.msra.mxu0 0.0
  %129 = vmatpush.msra.mxu0 0.0
  %130 = vmatpush.msra.mxu0 0.0
  %131 = vmatpush.msra.mxu0 0.0
  %132 = vmatpush.msra.mxu0 0.0
  %133 = vmatpush.msra.mxu0 0.0
  %134 = vmatpush.msra.mxu0 0.0
  %135 = vmatpush.msra.mxu0 0.0
  %136 = vmatpush.msra.mxu0 0.0
  %137 = vmatpush.msra.mxu0 0.0
  %138 = vmatpush.msra.mxu0 0.0
  %139 = vmatpush.msra.mxu0 0.0
  %140 = vmatpush.msra.mxu0 0.0
  %141 = vmatpush.msra.mxu0 0.0
  %142 = vmatpush.msra.mxu0 0.0
  %143 = vmatpush.msra.mxu0 %v62
  %144 = vmatmul.f32.gmra.mxu0 %v105
  %v145 = vpop.f32.mrf.mxu0
  %v146 = vadd.f32 %v66, %v145
  %147 = vmatmul.f32.gmra.mxu0 %v108
  %v148 = vpop.f32.mrf.mxu0
  %v149 = vadd.f32 %v71, %v148
  %150 = vmatmul.f32.gmra.mxu0 %v111
  %v151 = vpop.f32.mrf.mxu0
  %v152 = vadd.f32 %v76, %v151
  %153 = vmatmul.f32.gmra.mxu0 %v114
  %v154 = vpop.f32.mrf.mxu0
  %v155 = vadd.f32 %v81, %v154
  %156 = vmatmul.f32.gmra.mxu0 %v117
  %v157 = vpop.f32.mrf.mxu0
  %v158 = vadd.f32 %v86, %v157
  %159 = vmatmul.f32.gmra.mxu0 %v120
  %v160 = vpop.f32.mrf.mxu0
  %v161 = vadd.f32 %v91, %v160
  %162 = vmatmul.f32.gmra.mxu0 %v123
  %v163 = vpop.f32.mrf.mxu0
  %v164 = vadd.f32 %v96, %v163
  %165 = vmatmul.f32.gmra.mxu0 %v126
  %v166 = vpop.f32.mrf.mxu0
  %v167 = vadd.f32 %v101, %v166
  %168 = vdwg.mxu0
  %v169 = vtanh.pop %v146
  %v170 = vtanh.pop %v149
  %v171 = vtanh.pop %v152
  %v172 = vtanh.pop %v155
  %v173 = vtanh.pop %v158
  %v174 = vtanh.pop %v161
  %v175 = vtanh.pop %v164
  %v176 = vtanh.pop %v167
  %178 = vset.pattern.permute.xlu0 0
  %179 = vperm.xlu0 %178, %v44
  %v180 = vpop.permute.xlu0 %179
  %183 = vset.pattern.permute.xlu0 0
  %184 = vperm.xlu0 %183, %v45
  %v185 = vpop.permute.xlu0 %184
  %188 = vset.pattern.permute.xlu0 0
  %189 = vperm.xlu0 %188, %v46
  %v190 = vpop.permute.xlu0 %189
  %193 = vset.pattern.permute.xlu0 0
  %194 = vperm.xlu0 %193, %v47
  %v195 = vpop.permute.xlu0 %194
  %198 = vset.pattern.permute.xlu0 0
  %199 = vperm.xlu0 %198, %v48
  %v200 = vpop.permute.xlu0 %199
  %203 = vset.pattern.permute.xlu0 0
  %204 = vperm.xlu0 %203, %v49
  %v205 = vpop.permute.xlu0 %204
  %208 = vset.pattern.permute.xlu0 0
  %209 = vperm.xlu0 %208, %v50
  %v210 = vpop.permute.xlu0 %209
  %213 = vset.pattern.permute.xlu0 0
  %214 = vperm.xlu0 %213, %v51
  %v215 = vpop.permute.xlu0 %214
  %vm217 = vcmask 523264
  %v219 = vsel %vm217, %v53, 0
  %v222 = vsel %vm217, %v54, 0
  %v225 = vsel %vm217, %v55, 0
  %v228 = vsel %vm217, %v56, 0
  %v231 = vsel %vm217, %v57, 0
  %v234 = vsel %vm217, %v58, 0
  %v237 = vsel %vm217, %v59, 0
  %v240 = vsel %vm217, %v60, 0
  %242 = vmatpush.msra.mxu0 0.0
  %243 = vmatpush.msra.mxu0 0.0
  %244 = vmatpush.msra.mxu0 0.0
  %245 = vmatpush.msra.mxu0 0.0
  %246 = vmatpush.msra.mxu0 0.0
  %247 = vmatpush.msra.mxu0 0.0
  %248 = vmatpush.msra.mxu0 0.0
  %249 = vmatpush.msra.mxu0 0.0
  %250 = vmatpush.msra.mxu0 %v176
  %251 = vmatpush.msra.mxu0 %v175
  %252 = vmatpush.msra.mxu0 %v174
  %253 = vmatpush.msra.mxu0 %v173
  %254 = vmatpush.msra.mxu0 %v172
  %255 = vmatpush.msra.mxu0 %v171
  %256 = vmatpush.msra.mxu0 %v170
  %257 = vmatpush.msra.mxu0 %v169
  %258 = vmatmul.f32.gmra.mxu0 %v219
  %v259 = vpop.f32.mrf.mxu0
  %v260 = vadd.f32 %v180, %v259
  %261 = vmatmul.f32.gmra.mxu0 %v222
  %v262 = vpop.f32.mrf.mxu0
  %v263 = vadd.f32 %v185, %v262
  %264 = vmatmul.f32.gmra.mxu0 %v225
  %v265 = vpop.f32.mrf.mxu0
  %v266 = vadd.f32 %v190, %v265
  %267 = vmatmul.f32.gmra.mxu0 %v228
  %v268 = vpop.f32.mrf.mxu0
  %v269 = vadd.f32 %v195, %v268
  %270 = vmatmul.f32.gmra.mxu0 %v231
  %v271 = vpop.f32.mrf.mxu0
  %v272 = vadd.f32 %v200, %v271
  %273 = vmatmul.f32.gmra.mxu0 %v234
  %v274 = vpop.f32.mrf.mxu0
  %v275 = vadd.f32 %v205, %v274
  %276 = vmatmul.f32.gmra.mxu0 %v237
  %v277 = vpop.f32.mrf.mxu0
  %v278 = vadd.f32 %v210, %v277
  %279 = vmatmul.f32.gmra.mxu0 %v240
  %v280 = vpop.f32.mrf.mxu0
  %v281 = vadd.f32 %v215, %v280
  %282 = vdwg.mxu0
  %v283 = vtanh.pop %v260
  %v284 = vtanh.pop %v263
  %v285 = vtanh.pop %v266
  %v286 = vtanh.pop %v269
  %v287 = vtanh.pop %v272
  %v288 = vtanh.pop %v275
  %v289 = vtanh.pop %v278
  %v290 = vtanh.pop %v281
  %v292 = vsel %vm217, %v61, 0
  %294 = vmatpush.msra.mxu0 0.0
  %295 = vmatpush.msra.mxu0 0.0
  %296 = vmatpush.msra.mxu0 0.0
  %297 = vmatpush.msra.mxu0 0.0
  %298 = vmatpush.msra.mxu0 0.0
  %299 = vmatpush.msra.mxu0 0.0
  %300 = vmatpush.msra.mxu0 0.0
  %301 = vmatpush.msra.mxu0 0.0
  %302 = vmatpush.msra.mxu0 %v290
  %303 = vmatpush.msra.mxu0 %v289
  %304 = vmatpush.msra.mxu0 %v288
  %305 = vmatpush.msra.mxu0 %v287
  %306 = vmatpush.msra.mxu0 %v286
  %307 = vmatpush.msra.mxu0 %v285
  %308 = vmatpush.msra.mxu0 %v284
  %309 = vmatpush.msra.mxu0 %v283
  %310 = vmatmul.f32.gmra.mxu0 %v292
  %v311 = vpop.f32.mrf.mxu0
  %v312 = vadd.f32 0.0, %v311
  %313 = vdwg.mxu0
  %315 = vset.pattern.permute.xlu0 0
  %316 = vperm.xlu0 %315, %v52
  %v317 = vpop.permute.xlu0 %316
  %v319 = vperm.slane %v317, 0
  %v320 = vadd.f32 %v312, %v319
  %321 = vst [vmem:[%s7] sm:$0x1] %v320
  // Predicated region
  $region30: #{pinn_forward.1} parent=0 // pred_check
    _
  $region31: #{pinn_forward.1} parent=0 // pred_check_branch
    %323 = sbr.rel (0) target = $region33
  $region32: #{pinn_forward.1} parent=0 // pred_region
    _
  $region33: #{pinn_forward.1} parent=0 // pred_fallthru
    _
  // Predicated region
  $region34: #{pinn_forward.1} parent=0 // pred_check
    _
  $region35: #{pinn_forward.1} parent=0 // pred_check_branch
    %325 = sbr.rel (0) target = $region37
  $region36: #{pinn_forward.1} parent=0 // pred_region
    _
  $region37: #{pinn_forward.1} parent=0 // pred_fallthru
    _

</llo_original>
